<compile_context>
chip_gen: v6e
topology: v6e:2x2x1
jax: 0.10.0
libtpu: 0.0.40
codegen_flags: <defaults>
</compile_context>

<pallas_src>
import jax
import jax.numpy as jnp
from jax.experimental import pallas as pl
from jax.experimental.pallas import tpu as pltpu

EPS = 1e-5


def prenorm_kernel(x_ref, g_ref, b_ref, w_ref, wb_ref, o_ref):
    # x_ref : (C, TL)  channels on sublanes, length on lanes (lane-dense)
    # g_ref : (C, 1)   LayerNorm scale
    # b_ref : (C, 1)   LayerNorm shift
    # w_ref : (C, C)   fn (Conv1d 1x1) weight, [out, in]
    # wb_ref: (C, 1)   fn bias
    x = x_ref[...].astype(jnp.float32)

    # ---- LayerNorm over channels (sublane reduction, unbiased=False) ----
    mean = jnp.mean(x, axis=0, keepdims=True)                # (1, TL)
    centered = x - mean
    var = jnp.mean(centered * centered, axis=0, keepdims=True)
    inv = jax.lax.rsqrt(var + EPS)                           # (1, TL)
    xn = centered * inv * g_ref[...] + b_ref[...]            # (C, TL)

    # ---- fn: pointwise (1x1-conv) linear over channels ----
    # y[o, l] = sum_i W[o, i] * xn[i, l]  -> (C, C) @ (C, TL) on the MXU,
    # long L dimension on the MXU N axis.
    y = jnp.dot(w_ref[...], xn, preferred_element_type=jnp.float32)
    y = y + wb_ref[...]

    o_ref[...] = y.astype(o_ref.dtype)


def _pick_tl(L, target=512):
    """Pick a lane-dense length tile: multiple of 128 dividing L, else full L."""
    if L % 128 != 0:
        return L
    tl = min(target, L)
    tl -= tl % 128
    while L % tl != 0:
        tl -= 128
    return tl


def prenorm_pallas(x_ncl, g, b, w, wb, *, tl_target=512):
    """x_ncl: (B, C, L) float32.  g,b: (1, C, 1).  w: (C, C) conv1d-1x1 weight
    (out, in).  wb: (C,) bias.  Returns (B, C, L)."""
    B, C, L = x_ncl.shape
    TL = _pick_tl(L, tl_target)
    grid = (B, L // TL)

    # Pre-cast / reshape params once in the wrapper (hoisted out of the tile loop).
    g2 = g.reshape(C, 1).astype(jnp.float32)
    b2 = b.reshape(C, 1).astype(jnp.float32)
    w2 = w.astype(jnp.float32)
    wb2 = wb.reshape(C, 1).astype(jnp.float32)

    return pl.pallas_call(
        prenorm_kernel,
        out_shape=jax.ShapeDtypeStruct((B, C, L), x_ncl.dtype),
        grid=grid,
        in_specs=[
            # x: one (batch, full C, TL) slab per grid step; batch dim squeezed.
            pl.BlockSpec((None, C, TL), lambda bi, li: (bi, 0, li)),
            # Params: constant block index -> stay resident in VMEM.
            pl.BlockSpec((C, 1), lambda bi, li: (0, 0)),
            pl.BlockSpec((C, 1), lambda bi, li: (0, 0)),
            pl.BlockSpec((C, C), lambda bi, li: (0, 0)),
            pl.BlockSpec((C, 1), lambda bi, li: (0, 0)),
        ],
        out_specs=pl.BlockSpec((None, C, TL), lambda bi, li: (bi, 0, li)),
        compiler_params=pltpu.CompilerParams(
            dimension_semantics=("parallel", "parallel"),
            vmem_limit_bytes=32 * 1024 * 1024,
        ),
    )(x_ncl, g2, b2, w2, wb2)


def prenorm_reference(x_ncl, g, b, w, wb):
    """Pure-JAX reference mirroring the PyTorch module exactly."""
    mean = jnp.mean(x_ncl, axis=1, keepdims=True)
    var = jnp.mean((x_ncl - mean) ** 2, axis=1, keepdims=True)  # unbiased=False
    xn = (x_ncl - mean) / jnp.sqrt(var + EPS) * g + b
    # Conv1d(dim, dim, 1): y[b, o, l] = sum_i W[o, i] * xn[b, i, l] + bias[o]
    y = jnp.einsum("oi,bil->bol", w, xn) + wb[None, :, None]
    return y


if __name__ == "__main__":
    B, C, L = 2, 32, 512   # L multiple of 128 -> lane-dense tiles, 4 grid steps
    key = jax.random.PRNGKey(0)
    kx, kw, kb = jax.random.split(key, 3)

    x = jax.random.normal(kx, (B, C, L), dtype=jnp.float32)

    # LayerNorm params exactly as in the module __init__: ones / zeros.
    g = jnp.ones((1, C, 1), dtype=jnp.float32)
    b = jnp.zeros((1, C, 1), dtype=jnp.float32)

    # Deterministic synthetic fn (Conv1d(dim, dim, 1)) parameters.
    w = 0.1 * jax.random.normal(kw, (C, C), dtype=jnp.float32)
    wb = 0.1 * jax.random.normal(kb, (C,), dtype=jnp.float32)

    out = prenorm_pallas(x, g, b, w, wb, tl_target=256)
    out = jax.block_until_ready(out)

    ref = prenorm_reference(x, g, b, w, wb)
    assert out.shape == (B, C, L)
    assert jnp.max(jnp.abs(out - ref)) < 1e-4, "mismatch vs reference"

    print("KERNEL_OK")
</pallas_src>

<mosaic_0001>
module attributes {stable_mosaic.version = 11 : i64} {
  func.func @prenorm_kernel(%arg0: i32, %arg1: i32, %arg2: memref<1x32x256xf32, #tpu.memory_space<vmem>>, %arg3: memref<32x1xf32, #tpu.memory_space<vmem>>, %arg4: memref<32x1xf32, #tpu.memory_space<vmem>>, %arg5: memref<32x32xf32, #tpu.memory_space<vmem>>, %arg6: memref<32x1xf32, #tpu.memory_space<vmem>>, %arg7: memref<1x32x256xf32, #tpu.memory_space<vmem>>) attributes {dimension_semantics = [#tpu.dimension_semantics<parallel>, #tpu.dimension_semantics<parallel>], iteration_bounds = array<i64: 2, 2>, scalar_prefetch = 0 : i64, scratch_operands = 0 : i64, tpu.core_type = #tpu.core_type<tc>, window_params = [{transform_indices = @transform_0, window_bounds = array<i64: 1, 32, 256>}, {pipeline_mode = #tpu.pipeline_mode<synchronous>, transform_indices = @transform_1, window_bounds = array<i64: 32, 1>}, {pipeline_mode = #tpu.pipeline_mode<synchronous>, transform_indices = @transform_2, window_bounds = array<i64: 32, 1>}, {pipeline_mode = #tpu.pipeline_mode<synchronous>, transform_indices = @transform_3, window_bounds = array<i64: 32, 32>}, {pipeline_mode = #tpu.pipeline_mode<synchronous>, transform_indices = @transform_4, window_bounds = array<i64: 32, 1>}, {transform_indices = @transform_5, window_bounds = array<i64: 1, 32, 256>}]} {
    %c0 = arith.constant 0 : index
    %c0_0 = arith.constant 0 : index
    %c0_1 = arith.constant 0 : index
    %0 = vector.load %arg2[%c0, %c0_0, %c0_1] : memref<1x32x256xf32, #tpu.memory_space<vmem>>, vector<1x32x256xf32>
    %1 = vector.shape_cast %0 : vector<1x32x256xf32> to vector<32x256xf32>
    %cst = arith.constant dense<0.000000e+00> : vector<256xf32>
    %2 = vector.multi_reduction <add>, %1, %cst [0] : vector<32x256xf32> to vector<256xf32>
    %3 = vector.shape_cast %2 : vector<256xf32> to vector<1x256xf32>
    %cst_2 = arith.constant 3.200000e+01 : f32
    %4 = vector.broadcast %cst_2 : f32 to vector<1x256xf32>
    %5 = arith.divf %3, %4 : vector<1x256xf32>
    %6 = vector.broadcast %5 : vector<1x256xf32> to vector<32x256xf32>
    %7 = arith.subf %1, %6 : vector<32x256xf32>
    %8 = arith.mulf %7, %7 : vector<32x256xf32>
    %cst_3 = arith.constant dense<0.000000e+00> : vector<256xf32>
    %9 = vector.multi_reduction <add>, %8, %cst_3 [0] : vector<32x256xf32> to vector<256xf32>
    %10 = vector.shape_cast %9 : vector<256xf32> to vector<1x256xf32>
    %cst_4 = arith.constant 3.200000e+01 : f32
    %11 = vector.broadcast %cst_4 : f32 to vector<1x256xf32>
    %12 = arith.divf %10, %11 : vector<1x256xf32>
    %cst_5 = arith.constant 9.99999974E-6 : f32
    %13 = vector.broadcast %cst_5 : f32 to vector<1x256xf32>
    %14 = arith.addf %12, %13 : vector<1x256xf32>
    %15 = math.rsqrt %14 : vector<1x256xf32>
    %16 = vector.broadcast %15 : vector<1x256xf32> to vector<32x256xf32>
    %17 = arith.mulf %7, %16 : vector<32x256xf32>
    %c0_6 = arith.constant 0 : index
    %c0_7 = arith.constant 0 : index
    %18 = vector.load %arg3[%c0_6, %c0_7] : memref<32x1xf32, #tpu.memory_space<vmem>>, vector<32x1xf32>
    %19 = vector.broadcast %18 : vector<32x1xf32> to vector<32x256xf32>
    %20 = arith.mulf %17, %19 : vector<32x256xf32>
    %c0_8 = arith.constant 0 : index
    %c0_9 = arith.constant 0 : index
    %21 = vector.load %arg4[%c0_8, %c0_9] : memref<32x1xf32, #tpu.memory_space<vmem>>, vector<32x1xf32>
    %22 = vector.broadcast %21 : vector<32x1xf32> to vector<32x256xf32>
    %23 = arith.addf %20, %22 : vector<32x256xf32>
    %c0_10 = arith.constant 0 : index
    %c0_11 = arith.constant 0 : index
    %24 = vector.load %arg5[%c0_10, %c0_11] : memref<32x32xf32, #tpu.memory_space<vmem>>, vector<32x32xf32>
    %cst_12 = arith.constant dense<0.000000e+00> : vector<32x256xf32>
    %25 = tpu.matmul %24, %23, %cst_12 {dimension_numbers = #tpu.dot_dimension_numbers<[1], [0], [0], [1], [0, 0, 1, 1], [], []>} : vector<32x32xf32>, vector<32x256xf32>, vector<32x256xf32> -> vector<32x256xf32>
    %c0_13 = arith.constant 0 : index
    %c0_14 = arith.constant 0 : index
    %26 = vector.load %arg6[%c0_13, %c0_14] : memref<32x1xf32, #tpu.memory_space<vmem>>, vector<32x1xf32>
    %27 = vector.broadcast %26 : vector<32x1xf32> to vector<32x256xf32>
    %28 = arith.addf %25, %27 : vector<32x256xf32>
    %c0_15 = arith.constant 0 : index
    %c0_16 = arith.constant 0 : index
    %c0_17 = arith.constant 0 : index
    %29 = vector.load %arg7[%c0_15, %c0_16, %c0_17] : memref<1x32x256xf32, #tpu.memory_space<vmem>>, vector<1x32x256xf32>
    %30 = vector.shape_cast %29 : vector<1x32x256xf32> to vector<32x256xf32>
    %31 = vector.shape_cast %28 : vector<32x256xf32> to vector<1x32x256xf32>
    tpu.vector_store %arg7[%c0_15, %c0_16, %c0_17], %31 {strides = array<i32>} : memref<1x32x256xf32, #tpu.memory_space<vmem>>, vector<1x32x256xf32>,
    return
  }
  func.func @transform_0(%arg0: i32, %arg1: i32) -> (i32, i32, i32) {
    %c0_i32 = arith.constant 0 : i32
    %c0_i32_0 = arith.constant 0 : i32
    return %arg0, %c0_i32, %arg1 : i32, i32, i32
  }
  func.func @transform_1(%arg0: i32, %arg1: i32) -> (i32, i32) {
    %c0_i32 = arith.constant 0 : i32
    %c0_i32_0 = arith.constant 0 : i32
    %c0_i32_1 = arith.constant 0 : i32
    return %c0_i32, %c0_i32_0 : i32, i32
  }
  func.func @transform_2(%arg0: i32, %arg1: i32) -> (i32, i32) {
    %c0_i32 = arith.constant 0 : i32
    %c0_i32_0 = arith.constant 0 : i32
    %c0_i32_1 = arith.constant 0 : i32
    return %c0_i32, %c0_i32_0 : i32, i32
  }
  func.func @transform_3(%arg0: i32, %arg1: i32) -> (i32, i32) {
    %c0_i32 = arith.constant 0 : i32
    %c0_i32_0 = arith.constant 0 : i32
    %c0_i32_1 = arith.constant 0 : i32
    return %c0_i32, %c0_i32_0 : i32, i32
  }
  func.func @transform_4(%arg0: i32, %arg1: i32) -> (i32, i32) {
    %c0_i32 = arith.constant 0 : i32
    %c0_i32_0 = arith.constant 0 : i32
    %c0_i32_1 = arith.constant 0 : i32
    return %c0_i32, %c0_i32_0 : i32, i32
  }
  func.func @transform_5(%arg0: i32, %arg1: i32) -> (i32, i32, i32) {
    %c0_i32 = arith.constant 0 : i32
    %c0_i32_0 = arith.constant 0 : i32
    return %arg0, %c0_i32, %arg1 : i32, i32, i32
  }
}

</mosaic_0001>

<llo_original>
// kernel: tpu_custom_call.1
$region0: #{tpu_custom_call.1}
  #allocation0 [shape = 'u32[]', space=smem, size = 0x4, offset = 0x4, fixed_abs, tag = 'smem constant byte address 0x4 - core index']
  #allocation1 [shape = 'u32[144,128]{1,0:T(1,128)}', space=vmem, size = 0x12000, scoped, tag = 'internal scratch']
  %s0 = inlined_call_operand.hbm [shape: f32[2,32,512], index: 0, kind: input, shape index: {}]
  %s1 = inlined_call_operand.vmem [shape: f32[32,1], index: 1, kind: input, shape index: {}]
  %s2 = inlined_call_operand.vmem [shape: f32[32,1], index: 2, kind: input, shape index: {}]
  %s3 = inlined_call_operand.vmem [shape: f32[32,32], index: 3, kind: input, shape index: {}]
  %s4 = inlined_call_operand.vmem [shape: f32[32,1], index: 4, kind: input, shape index: {}]
  %s5 = inlined_call_operand.hbm [shape: f32[2,32,512], index: 5, kind: output, shape index: {}]
  %s6 = sld [smem:[#allocation0]]
  $region57: #{tpu_custom_call.1} parent=0
    _
  %s8 = ssub.s32 1, %s6
  %s9 = scalar_select 0, %s8, %s6
  $region1: #{tpu_custom_call.1} parent=0
    #allocation2 [shape = 'u8[65536]{0}', space=vmem, size = 0x10000, scoped, tag = 'input window, operand 0']
    #allocation3 [shape = 's32[2]{0}', space=sflag, size = 0x8, scoped, tag = 'scoped memory for tpu_custom_call.1']
    #allocation4 [shape = 's32[2]{0}', space=sflag, size = 0x8, scoped, tag = 'scoped memory for tpu_custom_call.1']
    #allocation5 [shape = 'u8[65536]{0}', space=vmem, size = 0x10000, scoped, tag = 'output window, operand 0']
    %10 = vsyncpa [#allocation3], 0
    %s11 = scalar_lea.sflag [#allocation3], 1
    %12 = vsyncpa %s11, 0
    %13 = vsyncpa [#allocation4], 0
    %s14 = scalar_lea.sflag [#allocation4], 1
    %15 = vsyncpa %s14, 0
    loop: start=0, step=1, limit=6
    $region2: #{tpu_custom_call.1} parent=1 // loop_pre_header
      _
    $region3: #{tpu_custom_call.1} parent=1 // loop_header
      %s17 = sphi 0, %s21
      %p18 = scmp.ge.s32.totalorder %s17, 6
      %s24 = sphi 0, %s36
      %s25 = sphi 0, %s32
      %s26 = sphi 0, %s24
      %s27 = sphi 0, %s25
      %s28 = sphi 0, %s26
      %s29 = sphi 0, %s27
      %s41 = sphi 0, %s43
      %s44 = sphi 0, %s41
      %s45 = sphi 0, %s44
      %s61 = sphi 0, %s45
      %s65 = sphi 0, %s65
      %s67 = sphi 0, %s65
      %s68 = sphi 0, %s67
      %s82 = sphi 0, %s68
      %s86 = sphi 0, %s86
      %s88 = sphi 0, %s86
      %s89 = sphi 0, %s88
      %s103 = sphi 0, %s89
      %s107 = sphi 0, %s107
      %s109 = sphi 0, %s107
      %s110 = sphi 0, %s109
      %s124 = sphi 0, %s110
      %s128 = sphi 0, %s128
      %s130 = sphi 0, %s128
      %s131 = sphi 0, %s130
      %s145 = sphi 0, %s131
      %s153 = sphi 0, %s155
      %s156 = sphi 0, %s153
      %s157 = sphi 0, %s156
      %s173 = sphi 0, %s157
    $region4: #{tpu_custom_call.1} parent=1 // loop_header_branch
      %20 = sbr.rel (%p18) target = $region8
    $region5: #{tpu_custom_call.1} parent=1 // loop_body
      %s22 = ssub.s32 %s17, 1
      %s23 = ssub.s32 %s17, 2
      %s30 = sadd.s32 1, %s25
      %p31 = scmp.ge.s32.totalorder %s30, 2
      %s32 = scalar_select %p31, 0, %s30
      %s33 = sadd.s32 1, %s24
      %s34 = scalar_select %p31, %s33, %s24
      %p35 = scmp.ge.s32.totalorder %s34, 2
      %s36 = scalar_select %p35, 0, %s34
      %s37 = ssub.s32 %s24, %s36
      %s38 = ssub.s32 %s25, %s32
      %s39 = sor.u32 %s37, %s38
      %p40 = scmp.eq.s32.totalorder %s39, 0
      %s42 = sadd.s32 %s41, 1
      %s43 = scalar_select %p40, %s41, %s42
      %p46 = pneg %p40
      %p47 = scmp.eq.s32.totalorder %s17, 3
      %p48 = por %p46, %p47
      %p49 = scmp.ne.s32.totalorder %s41, %s44
      %p50 = scmp.eq.s32.totalorder %s17, 0
      %p51 = por %p49, %p50
      %p52 = scmp.ne.s32.totalorder %s41, %s44
      %p53 = scmp.eq.s32.totalorder %s22, 3
      %p54 = por %p52, %p53
      %p55 = scmp.ne.s32.totalorder %s44, %s45
      %p56 = scmp.eq.s32.totalorder %s22, 0
      %p57 = por %p55, %p56
      %p58 = scmp.ne.s32.totalorder %s44, %s45
      %p59 = scmp.eq.s32.totalorder %s23, 3
      %p60 = por %p58, %p59
      %p62 = scmp.ne.s32.totalorder %s45, %s61
      %p63 = scmp.eq.s32.totalorder %s23, 0
      %p64 = por %p62, %p63
      %s66 = sadd.s32 %s65, 1
      %p69 = scmp.eq.s32.totalorder %s17, 3
      %p70 = scmp.ne.s32.totalorder %s65, %s67
      %p71 = scmp.eq.s32.totalorder %s17, 0
      %p72 = por %p70, %p71
      %p73 = scmp.ne.s32.totalorder %s65, %s67
      %p74 = scmp.eq.s32.totalorder %s22, 3
      %p75 = por %p73, %p74
      %p76 = scmp.ne.s32.totalorder %s67, %s68
      %p77 = scmp.eq.s32.totalorder %s22, 0
      %p78 = por %p76, %p77
      %p79 = scmp.ne.s32.totalorder %s67, %s68
      %p80 = scmp.eq.s32.totalorder %s23, 3
      %p81 = por %p79, %p80
      %p83 = scmp.ne.s32.totalorder %s68, %s82
      %p84 = scmp.eq.s32.totalorder %s23, 0
      %p85 = por %p83, %p84
      %s87 = sadd.s32 %s86, 1
      %p90 = scmp.eq.s32.totalorder %s17, 3
      %p91 = scmp.ne.s32.totalorder %s86, %s88
      %p92 = scmp.eq.s32.totalorder %s17, 0
      %p93 = por %p91, %p92
      %p94 = scmp.ne.s32.totalorder %s86, %s88
      %p95 = scmp.eq.s32.totalorder %s22, 3
      %p96 = por %p94, %p95
      %p97 = scmp.ne.s32.totalorder %s88, %s89
      %p98 = scmp.eq.s32.totalorder %s22, 0
      %p99 = por %p97, %p98
      %p100 = scmp.ne.s32.totalorder %s88, %s89
      %p101 = scmp.eq.s32.totalorder %s23, 3
      %p102 = por %p100, %p101
      %p104 = scmp.ne.s32.totalorder %s89, %s103
      %p105 = scmp.eq.s32.totalorder %s23, 0
      %p106 = por %p104, %p105
      %s108 = sadd.s32 %s107, 1
      %p111 = scmp.eq.s32.totalorder %s17, 3
      %p112 = scmp.ne.s32.totalorder %s107, %s109
      %p113 = scmp.eq.s32.totalorder %s17, 0
      %p114 = por %p112, %p113
      %p115 = scmp.ne.s32.totalorder %s107, %s109
      %p116 = scmp.eq.s32.totalorder %s22, 3
      %p117 = por %p115, %p116
      %p118 = scmp.ne.s32.totalorder %s109, %s110
      %p119 = scmp.eq.s32.totalorder %s22, 0
      %p120 = por %p118, %p119
      %p121 = scmp.ne.s32.totalorder %s109, %s110
      %p122 = scmp.eq.s32.totalorder %s23, 3
      %p123 = por %p121, %p122
      %p125 = scmp.ne.s32.totalorder %s110, %s124
      %p126 = scmp.eq.s32.totalorder %s23, 0
      %p127 = por %p125, %p126
      %s129 = sadd.s32 %s128, 1
      %p132 = scmp.eq.s32.totalorder %s17, 3
      %p133 = scmp.ne.s32.totalorder %s128, %s130
      %p134 = scmp.eq.s32.totalorder %s17, 0
      %p135 = por %p133, %p134
      %p136 = scmp.ne.s32.totalorder %s128, %s130
      %p137 = scmp.eq.s32.totalorder %s22, 3
      %p138 = por %p136, %p137
      %p139 = scmp.ne.s32.totalorder %s130, %s131
      %p140 = scmp.eq.s32.totalorder %s22, 0
      %p141 = por %p139, %p140
      %p142 = scmp.ne.s32.totalorder %s130, %s131
      %p143 = scmp.eq.s32.totalorder %s23, 3
      %p144 = por %p142, %p143
      %p146 = scmp.ne.s32.totalorder %s131, %s145
      %p147 = scmp.eq.s32.totalorder %s23, 0
      %p148 = por %p146, %p147
      %s149 = ssub.s32 %s24, %s36
      %s150 = ssub.s32 %s25, %s32
      %s151 = sor.u32 %s149, %s150
      %p152 = scmp.eq.s32.totalorder %s151, 0
      %s154 = sadd.s32 %s153, 1
      %s155 = scalar_select %p152, %s153, %s154
      %p158 = pneg %p152
      %p159 = scmp.eq.s32.totalorder %s17, 3
      %p160 = por %p158, %p159
      %p161 = scmp.ne.s32.totalorder %s153, %s156
      %p162 = scmp.eq.s32.totalorder %s17, 0
      %p163 = por %p161, %p162
      %p164 = scmp.ne.s32.totalorder %s153, %s156
      %p165 = scmp.eq.s32.totalorder %s22, 3
      %p166 = por %p164, %p165
      %p167 = scmp.ne.s32.totalorder %s156, %s157
      %p168 = scmp.eq.s32.totalorder %s22, 0
      %p169 = por %p167, %p168
      %p170 = scmp.ne.s32.totalorder %s156, %s157
      %p171 = scmp.eq.s32.totalorder %s23, 3
      %p172 = por %p170, %p171
      %p174 = scmp.ne.s32.totalorder %s157, %s173
      %p175 = scmp.eq.s32.totalorder %s23, 0
      %p176 = por %p174, %p175
      %p177 = scmp.le.s32.totalorder 1, %s17
      %p178 = scmp.lt.s32.totalorder %s17, 5
      %p179 = pnand %p177, %p178
      %p180 = pneg %p179
      // Predicated region
      $region9: #{tpu_custom_call.1} parent=5 // pred_check
        _
      $region10: #{tpu_custom_call.1} parent=5 // pred_check_branch
        %182 = sbr.rel (%p179) target = $region12
      $region11: #{tpu_custom_call.1} parent=5 // pred_region
        %s183 = ssub.s32 %s17, 1
        // Predicated region
        $region13: #{tpu_custom_call.1} parent=11 // pred_check
          %p184 = pneg %p78
        $region14: #{tpu_custom_call.1} parent=11 // pred_check_branch
          %186 = sbr.rel (%p184) target = $region16
        $region15: #{tpu_custom_call.1} parent=11 // pred_region
          _
        $region16: #{tpu_custom_call.1} parent=11 // pred_fallthru
          _
        // Predicated region
        $region17: #{tpu_custom_call.1} parent=11 // pred_check
          %p187 = pneg %p99
        $region18: #{tpu_custom_call.1} parent=11 // pred_check_branch
          %189 = sbr.rel (%p187) target = $region20
        $region19: #{tpu_custom_call.1} parent=11 // pred_region
          _
        $region20: #{tpu_custom_call.1} parent=11 // pred_fallthru
          _
        // Predicated region
        $region21: #{tpu_custom_call.1} parent=11 // pred_check
          %p190 = pneg %p120
        $region22: #{tpu_custom_call.1} parent=11 // pred_check_branch
          %192 = sbr.rel (%p190) target = $region24
        $region23: #{tpu_custom_call.1} parent=11 // pred_region
          _
        $region24: #{tpu_custom_call.1} parent=11 // pred_fallthru
          _
        // Predicated region
        $region25: #{tpu_custom_call.1} parent=11 // pred_check
          %p193 = pneg %p141
        $region26: #{tpu_custom_call.1} parent=11 // pred_check_branch
          %195 = sbr.rel (%p193) target = $region28
        $region27: #{tpu_custom_call.1} parent=11 // pred_region
          _
        $region28: #{tpu_custom_call.1} parent=11 // pred_fallthru
          _
      $region12: #{tpu_custom_call.1} parent=5 // pred_fallthru
        _
      %p196 = scmp.lt.s32.totalorder %s17, 4
      // Predicated region
      $region29: #{tpu_custom_call.1} parent=5 // pred_check
        %p197 = pneg %p196
      $region30: #{tpu_custom_call.1} parent=5 // pred_check_branch
        %199 = sbr.rel (%p197) target = $region32
      $region31: #{tpu_custom_call.1} parent=5 // pred_region
        // Predicated region
        $region33: #{tpu_custom_call.1} parent=31 // pred_check
          %p200 = pneg %p51
        $region34: #{tpu_custom_call.1} parent=31 // pred_check_branch
          %202 = sbr.rel (%p200) target = $region36
        $region35: #{tpu_custom_call.1} parent=31 // pred_region
          %s203 = sand.u32 %s41, 1
          %s204 = scalar_lea.sflag [#allocation3], %s203
          %s205 = sand.u32 %s41, 1
          %s206 = smul.addr %s205, 64
          %s207 = scalar_lea.vmem [#allocation2], %s206
          %s208 = smul.u32 2, %s25
          %s210 = ssub.s32 1024, 1024
          %211 = vsyncadd %s204, %s210
          %s212 = smul.addr %s24, 16
          %s213 = sadd.s32 %s208, %s212
          %s214 = smul.addr %s213, 128
          %s215 = scalar_lea.hbm %s0, %s214
          %s216 = sshll.u32 %s207, 4
          %s217 = int_to_ptr.vmem [resolvable:$true] %s216
          %222 = dma.hbm_to_vmem [thread:$0]  %s215, 1024, %s217, %s204, 512, 256, 16
        $region36: #{tpu_custom_call.1} parent=31 // pred_fallthru
          _
      $region32: #{tpu_custom_call.1} parent=5 // pred_fallthru
        _
      %p223 = scmp.le.s32.totalorder 1, %s17
      %p224 = scmp.lt.s32.totalorder %s17, 5
      %p225 = pnand %p223, %p224
      %p226 = pneg %p225
      // Predicated region
      $region37: #{tpu_custom_call.1} parent=5 // pred_check
        _
      $region38: #{tpu_custom_call.1} parent=5 // pred_check_branch
        %228 = sbr.rel (%p225) target = $region40
      $region39: #{tpu_custom_call.1} parent=5 // pred_region
        %s229 = ssub.s32 %s17, 1
        %s230 = sand.u32 %s44, 1
        %s231 = scalar_lea.sflag [#allocation3], %s230
        %s232 = sand.u32 %s44, 1
        %s233 = smul.addr %s232, 64
        %s234 = scalar_lea.vmem [#allocation2], %s233
        // Predicated region
        $region41: #{tpu_custom_call.1} parent=39 // pred_check
          %p235 = pneg %p57
        $region42: #{tpu_custom_call.1} parent=39 // pred_check_branch
          %237 = sbr.rel (%p235) target = $region44
        $region43: #{tpu_custom_call.1} parent=39 // pred_region
          %238 = dma.done %s231, 1024
        $region44: #{tpu_custom_call.1} parent=39 // pred_fallthru
          _
        %s239 = sand.u32 %s44, 1
        %s240 = scalar_lea.sflag [#allocation3], %s239
        %s241 = sand.u32 %s44, 1
        %s242 = smul.addr %s241, 64
        %s243 = scalar_lea.vmem [#allocation2], %s242
        %p244 = pneg %p57
        %p245 = pneg %p54
        %p246 = pneg %p78
        %p247 = pneg %p75
        %p248 = pneg %p99
        %p249 = pneg %p96
        %p250 = pneg %p120
        %p251 = pneg %p117
        %p252 = pneg %p141
        %p253 = pneg %p138
        %p254 = pneg %p169
        %p255 = pneg %p166
        %s256 = sand.u32 %s156, 1
        %s257 = scalar_lea.sflag [#allocation4], %s256
        %s258 = sand.u32 %s156, 1
        %s259 = smul.addr %s258, 64
        %s260 = scalar_lea.vmem [#allocation5], %s259
        %s261 = smul.u32 2, %s27
        %s262 = smul.u32 2, %s27
        %v263 = vld [vmem:[%s234] sm:$0xff]
        %v264 = vld [vmem:[%s234 + $0x8] sm:$0xff]
        %v265 = vld [vmem:[%s234 + $0x10] sm:$0xff]
        %v266 = vld [vmem:[%s234 + $0x18] sm:$0xff]
        %v267 = vld [vmem:[%s234 + $0x20] sm:$0xff]
        %v268 = vld [vmem:[%s234 + $0x28] sm:$0xff]
        %v269 = vld [vmem:[%s234 + $0x30] sm:$0xff]
        %v270 = vld [vmem:[%s234 + $0x38] sm:$0xff]
        %v271 = vadd.f32 %v263, %v265
        %v272 = vadd.f32 %v271, %v267
        %v273 = vadd.f32 %v272, %v269
        %v274 = vrot.slane %v273, 4
        %v275 = vadd.f32 %v273, %v274
        %v276 = vrot.slane %v275, 2
        %v277 = vadd.f32 %v275, %v276
        %v278 = vrot.slane %v277, 1
        %v279 = vadd.f32 %v277, %v278
        %v280 = vadd.f32 %v264, %v266
        %v281 = vadd.f32 %v280, %v268
        %v282 = vadd.f32 %v281, %v270
        %v283 = vrot.slane %v282, 4
        %v284 = vadd.f32 %v282, %v283
        %v285 = vrot.slane %v284, 2
        %v286 = vadd.f32 %v284, %v285
        %v287 = vrot.slane %v286, 1
        %v288 = vadd.f32 %v286, %v287
        %v289 = vrcp.pop 32.0
        %v290 = vmul.f32 %v279, %v289
        %v291 = vmul.f32 %v288, %v289
        %v292 = vsub.f32 %v263, %v290
        %v293 = vsub.f32 %v264, %v291
        %v294 = vsub.f32 %v265, %v290
        %v295 = vsub.f32 %v266, %v291
        %v296 = vsub.f32 %v267, %v290
        %v297 = vsub.f32 %v268, %v291
        %v298 = vsub.f32 %v269, %v290
        %v299 = vsub.f32 %v270, %v291
        %v300 = vmul.f32 %v292, %v292
        %v301 = vmul.f32 %v293, %v293
        %v302 = vmul.f32 %v294, %v294
        %v303 = vmul.f32 %v295, %v295
        %v304 = vmul.f32 %v296, %v296
        %v305 = vmul.f32 %v297, %v297
        %v306 = vmul.f32 %v298, %v298
        %v307 = vmul.f32 %v299, %v299
        %v308 = vadd.f32 %v300, %v302
        %v309 = vadd.f32 %v308, %v304
        %v310 = vadd.f32 %v309, %v306
        %v311 = vrot.slane %v310, 4
        %v312 = vadd.f32 %v310, %v311
        %v313 = vrot.slane %v312, 2
        %v314 = vadd.f32 %v312, %v313
        %v315 = vrot.slane %v314, 1
        %v316 = vadd.f32 %v314, %v315
        %v317 = vadd.f32 %v301, %v303
        %v318 = vadd.f32 %v317, %v305
        %v319 = vadd.f32 %v318, %v307
        %v320 = vrot.slane %v319, 4
        %v321 = vadd.f32 %v319, %v320
        %v322 = vrot.slane %v321, 2
        %v323 = vadd.f32 %v321, %v322
        %v324 = vrot.slane %v323, 1
        %v325 = vadd.f32 %v323, %v324
        %v326 = vmul.f32 %v316, %v289
        %v327 = vmul.f32 %v325, %v289
        %v328 = vadd.f32 %v326, 1e-05
        %v329 = vadd.f32 %v327, 1e-05
        %v330 = vrsqrt.pop %v328
        %v331 = vrsqrt.pop %v329
        %v332 = vmul.f32 %v292, %v330
        %v333 = vmul.f32 %v293, %v331
        %v334 = vmul.f32 %v294, %v330
        %v335 = vmul.f32 %v295, %v331
        %v336 = vmul.f32 %v296, %v330
        %v337 = vmul.f32 %v297, %v331
        %v338 = vmul.f32 %v298, %v330
        %v339 = vmul.f32 %v299, %v331
        %v340 = vld [vmem:[%s1] sm:$0xff]
        %v341 = vld [vmem:[%s1 + $0x8] sm:$0xff]
        %v342 = vld [vmem:[%s1 + $0x10] sm:$0xff]
        %v343 = vld [vmem:[%s1 + $0x18] sm:$0xff]
        %345 = vset.pattern.permute.xlu0 0
        %346 = vperm.xlu0 %345, %v340
        %v347 = vpop.permute.xlu0 %346
        %350 = vset.pattern.permute.xlu0 0
        %351 = vperm.xlu0 %350, %v341
        %v352 = vpop.permute.xlu0 %351
        %355 = vset.pattern.permute.xlu0 0
        %356 = vperm.xlu0 %355, %v342
        %v357 = vpop.permute.xlu0 %356
        %360 = vset.pattern.permute.xlu0 0
        %361 = vperm.xlu0 %360, %v343
        %v362 = vpop.permute.xlu0 %361
        %v364 = vmul.f32 %v332, %v347
        %v365 = vmul.f32 %v333, %v347
        %v366 = vmul.f32 %v334, %v352
        %v367 = vmul.f32 %v335, %v352
        %v368 = vmul.f32 %v336, %v357
        %v369 = vmul.f32 %v337, %v357
        %v370 = vmul.f32 %v338, %v362
        %v371 = vmul.f32 %v339, %v362
        %v372 = vld [vmem:[%s2] sm:$0xff]
        %v373 = vld [vmem:[%s2 + $0x8] sm:$0xff]
        %v374 = vld [vmem:[%s2 + $0x10] sm:$0xff]
        %v375 = vld [vmem:[%s2 + $0x18] sm:$0xff]
        %377 = vset.pattern.permute.xlu0 0
        %378 = vperm.xlu0 %377, %v372
        %v379 = vpop.permute.xlu0 %378
        %382 = vset.pattern.permute.xlu0 0
        %383 = vperm.xlu0 %382, %v373
        %v384 = vpop.permute.xlu0 %383
        %387 = vset.pattern.permute.xlu0 0
        %388 = vperm.xlu0 %387, %v374
        %v389 = vpop.permute.xlu0 %388
        %392 = vset.pattern.permute.xlu0 0
        %393 = vperm.xlu0 %392, %v375
        %v394 = vpop.permute.xlu0 %393
        %v396 = vadd.f32 %v364, %v379
        %v397 = vadd.f32 %v365, %v379
        %v398 = vadd.f32 %v366, %v384
        %v399 = vadd.f32 %v367, %v384
        %v400 = vadd.f32 %v368, %v389
        %v401 = vadd.f32 %v369, %v389
        %v402 = vadd.f32 %v370, %v394
        %v403 = vadd.f32 %v371, %v394
        %v404 = vld [vmem:[%s3] sm:$0xff]
        %v405 = vld [vmem:[%s3 + $0x8] sm:$0xff]
        %v406 = vld [vmem:[%s3 + $0x10] sm:$0xff]
        %v407 = vld [vmem:[%s3 + $0x18] sm:$0xff]
        %v408 = vld [vmem:[%s4] sm:$0xff]
        %v409 = vld [vmem:[%s4 + $0x8] sm:$0xff]
        %v410 = vld [vmem:[%s4 + $0x10] sm:$0xff]
        %v411 = vld [vmem:[%s4 + $0x18] sm:$0xff]
        %413 = vset.pattern.permute.xlu0 0
        %414 = vperm.xlu0 %413, %v408
        %v415 = vpop.permute.xlu0 %414
        %418 = vset.pattern.permute.xlu0 0
        %419 = vperm.xlu0 %418, %v409
        %v420 = vpop.permute.xlu0 %419
        %423 = vset.pattern.permute.xlu0 0
        %424 = vperm.xlu0 %423, %v410
        %v425 = vpop.permute.xlu0 %424
        %428 = vset.pattern.permute.xlu0 0
        %429 = vperm.xlu0 %428, %v411
        %v430 = vpop.permute.xlu0 %429
        %vm432 = vcmask 261120
        %v434 = vsel %vm432, %v404, 0
        %v437 = vsel %vm432, %v405, 0
        %v440 = vsel %vm432, %v406, 0
        %v443 = vsel %vm432, %v407, 0
        %445 = vmatprep.subr.mxu0 0.0
        %446 = vmatpush1.msra.mxu0 0.0
        %447 = vmatprep.subr.mxu0 0.0
        %448 = vmatpush1.msra.mxu0 0.0
        %449 = vmatprep.subr.mxu0 0.0
        %450 = vmatpush1.msra.mxu0 0.0
        %451 = vmatprep.subr.mxu0 0.0
        %452 = vmatpush1.msra.mxu0 0.0
        %453 = vmatprep.subr.mxu0 0.0
        %454 = vmatpush1.msra.mxu0 0.0
        %455 = vmatprep.subr.mxu0 0.0
        %456 = vmatpush1.msra.mxu0 0.0
        %457 = vmatprep.subr.mxu0 0.0
        %458 = vmatpush1.msra.mxu0 0.0
        %459 = vmatprep.subr.mxu0 0.0
        %460 = vmatpush1.msra.mxu0 0.0
        %461 = vmatprep.subr.mxu0 0.0
        %462 = vmatpush1.msra.mxu0 0.0
        %463 = vmatprep.subr.mxu0 0.0
        %464 = vmatpush1.msra.mxu0 0.0
        %465 = vmatprep.subr.mxu0 0.0
        %466 = vmatpush1.msra.mxu0 0.0
        %467 = vmatprep.subr.mxu0 0.0
        %468 = vmatpush1.msra.mxu0 0.0
        %469 = vmatprep.subr.mxu0 %v403
        %470 = vmatpush1.msra.mxu0 %v402
        %471 = vmatprep.subr.mxu0 %v401
        %472 = vmatpush1.msra.mxu0 %v400
        %473 = vmatprep.subr.mxu0 %v399
        %474 = vmatpush1.msra.mxu0 %v398
        %475 = vmatprep.subr.mxu0 %v397
        %476 = vmatpush1.msra.mxu0 %v396
        %477 = vmatprep.subr.mxu0 0.0
        %478 = vmatpush2.msra.mxu0 0.0
        %479 = vmatprep.subr.mxu0 0.0
        %480 = vmatpush2.msra.mxu0 0.0
        %481 = vmatprep.subr.mxu0 0.0
        %482 = vmatpush2.msra.mxu0 0.0
        %483 = vmatprep.subr.mxu0 0.0
        %484 = vmatpush2.msra.mxu0 0.0
        %485 = vmatprep.subr.mxu0 0.0
        %486 = vmatpush2.msra.mxu0 0.0
        %487 = vmatprep.subr.mxu0 0.0
        %488 = vmatpush2.msra.mxu0 0.0
        %489 = vmatprep.subr.mxu0 0.0
        %490 = vmatpush2.msra.mxu0 0.0
        %491 = vmatprep.subr.mxu0 0.0
        %492 = vmatpush2.msra.mxu0 0.0
        %493 = vmatprep.subr.mxu0 0.0
        %494 = vmatpush2.msra.mxu0 0.0
        %495 = vmatprep.subr.mxu0 0.0
        %496 = vmatpush2.msra.mxu0 0.0
        %497 = vmatprep.subr.mxu0 0.0
        %498 = vmatpush2.msra.mxu0 0.0
        %499 = vmatprep.subr.mxu0 0.0
        %500 = vmatpush2.msra.mxu0 0.0
        %501 = vmatprep.subr.mxu0 0.0
        %502 = vmatpush2.msra.mxu0 0.0
        %503 = vmatprep.subr.mxu0 0.0
        %504 = vmatpush2.msra.mxu0 0.0
        %505 = vmatprep.subr.mxu0 0.0
        %506 = vmatpush2.msra.mxu0 0.0
        %507 = vmatprep.subr.mxu0 0.0
        %508 = vmatpush2.msra.mxu0 0.0
        %509 = vmatprep.mubr.f32.mxu0 0.0
        %510 = vmatmul.mubr.f32.gmra.mxu0 %v434
        %v511 = vpop.f32.mrf.mxu0
        %v512 = vadd.f32 %v415, %v511
        %v513 = vpop.f32.mrf.mxu0
        %v514 = vadd.f32 %v415, %v513
        %515 = vmatprep.mubr.f32.mxu0 0.0
        %516 = vmatmul.mubr.f32.gmra.mxu0 %v437
        %v517 = vpop.f32.mrf.mxu0
        %v518 = vadd.f32 %v420, %v517
        %v519 = vpop.f32.mrf.mxu0
        %v520 = vadd.f32 %v420, %v519
        %521 = vmatprep.mubr.f32.mxu0 0.0
        %522 = vmatmul.mubr.f32.gmra.mxu0 %v440
        %v523 = vpop.f32.mrf.mxu0
        %v524 = vadd.f32 %v425, %v523
        %v525 = vpop.f32.mrf.mxu0
        %v526 = vadd.f32 %v425, %v525
        %527 = vmatprep.mubr.f32.mxu0 0.0
        %528 = vmatmul.mubr.f32.gmra.mxu0 %v443
        %v529 = vpop.f32.mrf.mxu0
        %v530 = vadd.f32 %v430, %v529
        %v531 = vpop.f32.mrf.mxu0
        %v532 = vadd.f32 %v430, %v531
        %533 = vdwg.mxu0
        %534 = vst [vmem:[%s260] sm:$0xff] %v512
        %535 = vst [vmem:[%s260 + $0x8] sm:$0xff] %v514
        %536 = vst [vmem:[%s260 + $0x10] sm:$0xff] %v518
        %537 = vst [vmem:[%s260 + $0x18] sm:$0xff] %v520
        %538 = vst [vmem:[%s260 + $0x20] sm:$0xff] %v524
        %539 = vst [vmem:[%s260 + $0x28] sm:$0xff] %v526
        %540 = vst [vmem:[%s260 + $0x30] sm:$0xff] %v530
        %541 = vst [vmem:[%s260 + $0x38] sm:$0xff] %v532
        %s542 = sand.u32 %s156, 1
        %s543 = scalar_lea.sflag [#allocation4], %s542
        %s544 = sand.u32 %s156, 1
        %s545 = smul.addr %s544, 64
        %s546 = scalar_lea.vmem [#allocation5], %s545
        // Predicated region
        $region45: #{tpu_custom_call.1} parent=39 // pred_check
          %p547 = pneg %p166
        $region46: #{tpu_custom_call.1} parent=39 // pred_check_branch
          %549 = sbr.rel (%p547) target = $region48
        $region47: #{tpu_custom_call.1} parent=39 // pred_region
          %s550 = smul.u32 2, %s27
          %s552 = ssub.s32 1024, 1024
          %553 = vsyncadd %s543, %s552
          %s554 = smul.addr %s26, 16
          %s555 = sadd.s32 %s550, %s554
          %s556 = smul.addr %s555, 128
          %s557 = scalar_lea.hbm %s5, %s556
          %s558 = sshll.u32 %s546, 4
          %s559 = int_to_ptr.vmem [resolvable:$true] %s558
          %564 = dma.vmem_to_hbm [thread:$0]  %s559, 1024, %s557, %s543, 256, 512, 16
        $region48: #{tpu_custom_call.1} parent=39 // pred_fallthru
          _
      $region40: #{tpu_custom_call.1} parent=5 // pred_fallthru
        _
      %p565 = scmp.le.s32.totalorder 2, %s17
      // Predicated region
      $region49: #{tpu_custom_call.1} parent=5 // pred_check
        %p566 = pneg %p565
      $region50: #{tpu_custom_call.1} parent=5 // pred_check_branch
        %568 = sbr.rel (%p566) target = $region52
      $region51: #{tpu_custom_call.1} parent=5 // pred_region
        %s569 = ssub.s32 %s17, 2
        // Predicated region
        $region53: #{tpu_custom_call.1} parent=51 // pred_check
          %p570 = pneg %p172
        $region54: #{tpu_custom_call.1} parent=51 // pred_check_branch
          %572 = sbr.rel (%p570) target = $region56
        $region55: #{tpu_custom_call.1} parent=51 // pred_region
          %s573 = sand.u32 %s157, 1
          %s574 = scalar_lea.sflag [#allocation4], %s573
          %s575 = sand.u32 %s157, 1
          %s576 = smul.addr %s575, 64
          %s577 = scalar_lea.vmem [#allocation5], %s576
          %578 = dma.done %s574, 1024
        $region56: #{tpu_custom_call.1} parent=51 // pred_fallthru
          _
      $region52: #{tpu_custom_call.1} parent=5 // pred_fallthru
        _
    $region6: #{tpu_custom_call.1} parent=1 // loop_footer
      %s21 = sadd.s32 1, %s17
    $region7: #{tpu_custom_call.1} parent=1 // loop_footer_branch
      %16 = sbr.rel target = $region3
    $region8: #{tpu_custom_call.1} parent=1 // loop_exit
      _
    %579 = vsyncpa [#allocation3], 1
    %s580 = scalar_lea.sflag [#allocation3], 1
    %581 = vsyncpa %s580, 1
    %582 = vsyncpa [#allocation4], 1
    %s583 = scalar_lea.sflag [#allocation4], 1
    %584 = vsyncpa %s583, 1

</llo_original>
